<compile_context>
chip_gen: v7x
topology: tpu7x:2x2x1
jax: 0.10.0
libtpu: 0.0.40
codegen_flags: <defaults>
</compile_context>

<pallas_src>
import functools

import jax
import jax.numpy as jnp
from jax.experimental import pallas as pl
from jax.experimental.pallas import tpu as pltpu


def _round_up(v: int, m: int) -> int:
    return (v + m - 1) // m * m


def _vmem_capacity_bytes() -> int:
    """Per-core VMEM capacity; conservative fallback if the query fails."""
    try:
        return int(pltpu.get_tpu_info().vmem_capacity_bytes)
    except Exception:
        return 64 * 1024 * 1024  # v7x per-TC size; safe lower bound everywhere


def _fused_heads_kernel(x_ref, w_ref, b_ref, o_ref):
    """Grid = (N_tiles,).  Full-D operands; one matmul + bias per N tile.

    x_ref: [B_pad, D_pad]   bf16  (constant index_map -> resident in VMEM)
    w_ref: [D_pad, N_tile]  bf16  (fused, lane-padded head weights)
    b_ref: [1, N_tile]      f32   (fused, lane-padded head biases)
    o_ref: [B_pad, N_tile]  f32
    """
    o_ref[...] = (
        jnp.dot(x_ref[...], w_ref[...], preferred_element_type=jnp.float32)
        + b_ref[...]
    ).astype(o_ref.dtype)


def prepare_all_classifiers(weights, biases, names):
    """One-time fusion / cast of all heads (hoisted out of the hot path).

    weights: [K, D, C] stacked head weights (feature-major: logits = x @ W[k])
    biases:  [K, 1, C] (or [K, C]) stacked head biases
    names:   list of K head names
    """
    K, D, C = weights.shape
    biases2d = jnp.asarray(biases).reshape(K, C)
    assert len(names) == K

    C_pad = _round_up(C, 128)          # lane-dense per-head column block
    D_pad = _round_up(D, 128)          # clean layout for the MXU feed
    N_heads = K * C_pad                # fused output width (multiple of 128)

    w_p = jnp.pad(weights, ((0, 0), (0, D_pad - D), (0, C_pad - C)))
    w_fused = (
        jnp.transpose(w_p, (1, 0, 2)).reshape(D_pad, N_heads).astype(jnp.bfloat16)
    )
    b_fused = (
        jnp.pad(biases2d, ((0, 0), (0, C_pad - C)))
        .reshape(1, N_heads)
        .astype(jnp.float32)
    )

    return {
        "w_fused": w_fused,
        "b_fused": b_fused,
        "names": tuple(names),
        "D": D,
        "C": C,
        "C_pad": C_pad,
        "K": K,
    }


def all_classifiers_forward(x, prepared, *, n_tile_max=2048):
    """Run all linear classifier heads on the same [B, D] features.

    Returns {name: [B, C] float32 logits} (same as the PyTorch module).
    """
    w_fused = prepared["w_fused"]
    b_fused = prepared["b_fused"]
    names = prepared["names"]
    C = prepared["C"]
    C_pad = prepared["C_pad"]
    D = prepared["D"]

    B, Dx = x.shape
    assert Dx == D
    D_pad, N_heads = w_fused.shape

    # bf16 packs two rows per sublane -> pad B to a multiple of 16.
    B_pad = max(_round_up(B, 16), 16)
    x_p = jnp.pad(x, ((0, B_pad - B), (0, D_pad - D))).astype(jnp.bfloat16)

    # ---- tile selection against the live-VMEM budget of this generation ----
    cap = _vmem_capacity_bytes()
    budget = int(cap * 0.70)  # headroom for compiler internals / semaphores

    def live_bytes(nt):
        return (
            2 * B_pad * D_pad * 2      # resident x (counted 2x for safety)
            + 2 * D_pad * nt * 2       # double-buffered bf16 weight tiles
            + 2 * 8 * nt * 4           # double-buffered bias tiles (sublane-padded)
            + 2 * B_pad * nt * 4       # double-buffered f32 output tiles
        )

    # Largest multiple-of-128 exact divisor of N_heads that fits the budget.
    n_tile = 128
    t = 128
    while t <= min(N_heads, n_tile_max):
        if N_heads % t == 0 and live_bytes(t) <= budget:
            n_tile = t
        t += 128
    n_tiles = N_heads // n_tile
    # TODO(synk): if live_bytes(128) > budget (huge B*D), fall back to a
    # D-tiled reduction grid with an f32 accumulator scratch.

    vmem_limit = min(
        max(int(live_bytes(n_tile) * 1.5), 16 * 1024 * 1024),
        int(cap * 0.85),
    )

    cost = pl.CostEstimate(
        flops=2 * B_pad * D_pad * N_heads,
        transcendentals=0,
        bytes_accessed=(
            B_pad * D_pad * 2        # x read once (resident)
            + D_pad * N_heads * 2    # fused weights read once
            + N_heads * 4            # fused bias read once
            + B_pad * N_heads * 4    # logits written once
        ),
    )

    stacked = pl.pallas_call(
        _fused_heads_kernel,
        out_shape=jax.ShapeDtypeStruct((B_pad, N_heads), jnp.float32),
        grid_spec=pltpu.PrefetchScalarGridSpec(
            num_scalar_prefetch=0,
            grid=(n_tiles,),
            in_specs=[
                # Full-D features, constant block index -> DMA'd once, resident.
                pl.BlockSpec((B_pad, D_pad), lambda n: (0, 0)),
                # Full-D weight column tile, streamed over the N axis.
                pl.BlockSpec((D_pad, n_tile), lambda n: (0, n)),
                # Fused bias tile.
                pl.BlockSpec((1, n_tile), lambda n: (0, n)),
            ],
            out_specs=pl.BlockSpec((B_pad, n_tile), lambda n: (0, n)),
        ),
        compiler_params=pltpu.CompilerParams(
            # Single N axis is parallel -> v7x's 2 TensorCores split the heads.
            dimension_semantics=("parallel",),
            vmem_limit_bytes=vmem_limit,
        ),
        cost_estimate=cost,
    )(x_p, w_fused, b_fused)

    # Per-head dict view of the fused slab (cheap slices under the caller's jit).
    return {
        name: stacked[:B, k * C_pad : k * C_pad + C]
        for k, name in enumerate(names)
    }


def all_classifiers(x, weights, biases, names, **kw):
    """Convenience one-shot wrapper (fuse + forward)."""
    return all_classifiers_forward(x, prepare_all_classifiers(weights, biases, names), **kw)


if __name__ == "__main__":
    # Small, deterministic setup: 3 linear classifier heads over the same
    # DINOv2-style (already flattened) feature vector.
    B, D, C, K = 8, 32, 16, 3
    names = [f"classifier_head_{i}" for i in range(K)]

    key = jax.random.PRNGKey(0)
    kx, kw, kb = jax.random.split(key, 3)
    x = jax.random.normal(kx, (B, D), dtype=jnp.float32)
    weights = jax.random.normal(kw, (K, D, C), dtype=jnp.float32) * 0.02
    biases = jax.random.normal(kb, (K, 1, C), dtype=jnp.float32) * 0.01

    # Fuse / cast the heads once (hoisted out of the hot path), then forward.
    prepared = prepare_all_classifiers(weights, biases, names)
    fwd = functools.partial(all_classifiers_forward, prepared=prepared)
    out = fwd(x)
    jax.block_until_ready(out)

    # Reference check against plain JAX (same math as nn.Linear per head).
    # Kernel uses bf16 operands with f32 accumulation -> bf16-level tolerance.
    for i, name in enumerate(names):
        ref = x @ weights[i] + biases[i, 0][None, :]
        assert out[name].shape == (B, C)
        assert out[name].dtype == jnp.float32
        assert jnp.allclose(out[name], ref, atol=1e-2, rtol=1e-2), name

    print("KERNEL_OK")
</pallas_src>

<mosaic_0001>
module attributes {stable_mosaic.version = 11 : i64} {
  func.func @_fused_heads_kernel(%arg0: i32, %arg1: memref<16x128xbf16, #tpu.memory_space<vmem>>, %arg2: memref<128x384xbf16, #tpu.memory_space<vmem>>, %arg3: memref<1x384xf32, #tpu.memory_space<vmem>>, %arg4: memref<16x384xf32, #tpu.memory_space<vmem>>) attributes {dimension_semantics = [#tpu.dimension_semantics<parallel>], iteration_bounds = array<i64: 1>, scalar_prefetch = 0 : i64, scratch_operands = 0 : i64, tpu.core_type = #tpu.core_type<tc>, window_params = [{pipeline_mode = #tpu.pipeline_mode<synchronous>, transform_indices = @transform_0, window_bounds = array<i64: 16, 128>}, {transform_indices = @transform_1, window_bounds = array<i64: 128, 384>}, {transform_indices = @transform_2, window_bounds = array<i64: 1, 384>}, {transform_indices = @transform_3, window_bounds = array<i64: 16, 384>}]} {
    %c0 = arith.constant 0 : index
    %c0_0 = arith.constant 0 : index
    %0 = vector.load %arg1[%c0, %c0_0] : memref<16x128xbf16, #tpu.memory_space<vmem>>, vector<16x128xbf16>
    %c0_1 = arith.constant 0 : index
    %c0_2 = arith.constant 0 : index
    %1 = vector.load %arg2[%c0_1, %c0_2] : memref<128x384xbf16, #tpu.memory_space<vmem>>, vector<128x384xbf16>
    %cst = arith.constant dense<0.000000e+00> : vector<16x384xf32>
    %2 = tpu.matmul %0, %1, %cst {dimension_numbers = #tpu.dot_dimension_numbers<[1], [0], [0], [1], [0, 0, 1, 1], [], []>} : vector<16x128xbf16>, vector<128x384xbf16>, vector<16x384xf32> -> vector<16x384xf32>
    %c0_3 = arith.constant 0 : index
    %c0_4 = arith.constant 0 : index
    %3 = vector.load %arg3[%c0_3, %c0_4] : memref<1x384xf32, #tpu.memory_space<vmem>>, vector<1x384xf32>
    %4 = vector.broadcast %3 : vector<1x384xf32> to vector<16x384xf32>
    %5 = arith.addf %2, %4 : vector<16x384xf32>
    %c0_5 = arith.constant 0 : index
    %c0_6 = arith.constant 0 : index
    %6 = vector.load %arg4[%c0_5, %c0_6] : memref<16x384xf32, #tpu.memory_space<vmem>>, vector<16x384xf32>
    tpu.vector_store %arg4[%c0_5, %c0_6], %5 {strides = array<i32>} : memref<16x384xf32, #tpu.memory_space<vmem>>, vector<16x384xf32>,
    return
  }
  func.func @transform_0(%arg0: i32) -> (i32, i32) {
    %c0_i32 = arith.constant 0 : i32
    %c0_i32_0 = arith.constant 0 : i32
    %c0_i32_1 = arith.constant 0 : i32
    return %c0_i32, %c0_i32_0 : i32, i32
  }
  func.func @transform_1(%arg0: i32) -> (i32, i32) {
    %c0_i32 = arith.constant 0 : i32
    %c0_i32_0 = arith.constant 0 : i32
    return %c0_i32, %arg0 : i32, i32
  }
  func.func @transform_2(%arg0: i32) -> (i32, i32) {
    %c0_i32 = arith.constant 0 : i32
    %c0_i32_0 = arith.constant 0 : i32
    return %c0_i32, %arg0 : i32, i32
  }
  func.func @transform_3(%arg0: i32) -> (i32, i32) {
    %c0_i32 = arith.constant 0 : i32
    %c0_i32_0 = arith.constant 0 : i32
    return %c0_i32, %arg0 : i32, i32
  }
}

</mosaic_0001>

<llo_original>
// kernel: tpu_custom_call.1
$region0: #{tpu_custom_call.1}
  #allocation0 [shape = 'u32[]', space=smem, size = 0x4, offset = 0x4, fixed_abs, tag = 'smem constant byte address 0x4 - core index']
  #allocation1 [shape = 'u32[144,128]{1,0:T(1,128)}', space=vmem, size = 0x12000, scoped, tag = 'internal scratch']
  %s0 = inlined_call_operand.hbm [shape: bf16[16,128], index: 0, kind: input, shape index: {}]
  %s1 = inlined_call_operand.hbm [shape: bf16[128,384], index: 1, kind: input, shape index: {}]
  %s2 = inlined_call_operand.vmem [shape: f32[1,384], index: 2, kind: input, shape index: {}]
  %s3 = inlined_call_operand.hbm [shape: f32[16,384], index: 3, kind: output, shape index: {}]
  %s4 = sld [smem:[#allocation0]]
  $region30: #{tpu_custom_call.1} parent=0
    _
  %s6 = ssub.s32 1, %s4
  %s7 = scalar_select 0, %s6, %s4
  $region1: #{tpu_custom_call.1} parent=0
    #allocation2 [shape = 'u8[4096]{0}', space=vmem, size = 0x1000, scoped, tag = 'input window, operand 0, single buffered']
    #allocation3 [shape = 's32[1]{0}', space=sflag, size = 0x4, scoped, tag = 'scoped memory for tpu_custom_call.1']
    #allocation4 [shape = 's32[1]{0}', space=sflag, size = 0x4, scoped, tag = 'scoped memory for tpu_custom_call.1']
    #allocation5 [shape = 'u8[98304]{0}', space=vmem, size = 0x18000, scoped, tag = 'input window, operand 1, single buffered']
    #allocation6 [shape = 's32[1]{0}', space=sflag, size = 0x4, scoped, tag = 'scoped memory for tpu_custom_call.1']
    #allocation7 [shape = 'u8[24576]{0}', space=vmem, size = 0x6000, scoped, tag = 'output window, operand 0, single buffered']
    %8 = vsyncpa [#allocation3], 0
    %9 = vsyncpa [#allocation6], 0
    %10 = vsyncpa [#allocation4], 0
    // Predicated region
    $region2: #{tpu_custom_call.1} parent=1 // pred_check
      _
    $region3: #{tpu_custom_call.1} parent=1 // pred_check_branch
      %12 = sbr.rel (0) target = $region5
    $region4: #{tpu_custom_call.1} parent=1 // pred_region
      %s14 = ssub.s32 128, 128
      %15 = vsyncadd [#allocation3], %s14
      %s16 = sshll.u32 [#allocation2], 4
      %s17 = int_to_ptr.vmem [resolvable:$true] %s16
      %22 = dma.hbm_to_vmem [thread:$0]  %s0, 128, %s17, [#allocation3], 64, 64, 4
    $region5: #{tpu_custom_call.1} parent=1 // pred_fallthru
      _
    // Predicated region
    $region6: #{tpu_custom_call.1} parent=1 // pred_check
      _
    $region7: #{tpu_custom_call.1} parent=1 // pred_check_branch
      %24 = sbr.rel (0) target = $region9
    $region8: #{tpu_custom_call.1} parent=1 // pred_region
      %s26 = ssub.s32 3072, 3072
      %27 = vsyncadd [#allocation6], %s26
      %s28 = sshll.u32 [#allocation5], 4
      %s29 = int_to_ptr.vmem [resolvable:$true] %s28
      %34 = dma.hbm_to_vmem [thread:$0]  %s1, 3072, %s29, [#allocation6], 192, 192, 12
    $region9: #{tpu_custom_call.1} parent=1 // pred_fallthru
      _
    // Predicated region
    $region10: #{tpu_custom_call.1} parent=1 // pred_check
      _
    $region11: #{tpu_custom_call.1} parent=1 // pred_check_branch
      %36 = sbr.rel (0) target = $region13
    $region12: #{tpu_custom_call.1} parent=1 // pred_region
      _
    $region13: #{tpu_custom_call.1} parent=1 // pred_fallthru
      _
    // Predicated region
    $region14: #{tpu_custom_call.1} parent=1 // pred_check
      _
    $region15: #{tpu_custom_call.1} parent=1 // pred_check_branch
      %38 = sbr.rel (0) target = $region17
    $region16: #{tpu_custom_call.1} parent=1 // pred_region
      %39 = dma.done [#allocation3], 128
    $region17: #{tpu_custom_call.1} parent=1 // pred_fallthru
      _
    // Predicated region
    $region18: #{tpu_custom_call.1} parent=1 // pred_check
      _
    $region19: #{tpu_custom_call.1} parent=1 // pred_check_branch
      %41 = sbr.rel (0) target = $region21
    $region20: #{tpu_custom_call.1} parent=1 // pred_region
      %42 = dma.done [#allocation6], 3072
    $region21: #{tpu_custom_call.1} parent=1 // pred_fallthru
      _
    %v44 = vld [vmem:[#allocation2] sm:$0xf]
    %v45 = vld [vmem:[#allocation2 + $0x4] sm:$0xf]
    %v46 = vld [vmem:[#allocation5] sm:$0xff]
    %v47 = vld [vmem:[#allocation5 + $0x8] sm:$0xf]
    %v48 = vld [vmem:[#allocation5 + $0xc] sm:$0xff]
    %v49 = vld [vmem:[#allocation5 + $0x14] sm:$0xf]
    %v50 = vld [vmem:[#allocation5 + $0x18] sm:$0xff]
    %v51 = vld [vmem:[#allocation5 + $0x20] sm:$0xf]
    %v52 = vld [vmem:[#allocation5 + $0x24] sm:$0xff]
    %v53 = vld [vmem:[#allocation5 + $0x2c] sm:$0xf]
    %v54 = vld [vmem:[#allocation5 + $0x30] sm:$0xff]
    %v55 = vld [vmem:[#allocation5 + $0x38] sm:$0xf]
    %v56 = vld [vmem:[#allocation5 + $0x3c] sm:$0xff]
    %v57 = vld [vmem:[#allocation5 + $0x44] sm:$0xf]
    %v58 = vld [vmem:[#allocation5 + $0x48] sm:$0xff]
    %v59 = vld [vmem:[#allocation5 + $0x50] sm:$0xf]
    %v60 = vld [vmem:[#allocation5 + $0x54] sm:$0xff]
    %v61 = vld [vmem:[#allocation5 + $0x5c] sm:$0xf]
    %v62 = vld [vmem:[#allocation5 + $0x60] sm:$0xff]
    %v63 = vld [vmem:[#allocation5 + $0x68] sm:$0xf]
    %v64 = vld [vmem:[#allocation5 + $0x6c] sm:$0xff]
    %v65 = vld [vmem:[#allocation5 + $0x74] sm:$0xf]
    %v66 = vld [vmem:[#allocation5 + $0x78] sm:$0xff]
    %v67 = vld [vmem:[#allocation5 + $0x80] sm:$0xf]
    %v68 = vld [vmem:[#allocation5 + $0x84] sm:$0xff]
    %v69 = vld [vmem:[#allocation5 + $0x8c] sm:$0xf]
    %v70 = vld [vmem:[#allocation5 + $0x90] sm:$0xff]
    %v71 = vld [vmem:[#allocation5 + $0x98] sm:$0xf]
    %v72 = vld [vmem:[#allocation5 + $0x9c] sm:$0xff]
    %v73 = vld [vmem:[#allocation5 + $0xa4] sm:$0xf]
    %v74 = vld [vmem:[#allocation5 + $0xa8] sm:$0xff]
    %v75 = vld [vmem:[#allocation5 + $0xb0] sm:$0xf]
    %v76 = vld [vmem:[#allocation5 + $0xb4] sm:$0xff]
    %v77 = vld [vmem:[#allocation5 + $0xbc] sm:$0xf]
    %v78 = vld [vmem:[%s2] sm:$0x7]
    %v80 = vlaneseq
    %v81 = vshrl.u32 %v80, 7
    %v82 = vsub.s32 0, %v81
    %v83 = vrot.slane %v78, %v82
    %v84 = vlaneseq
    %v85 = vshrl.u32 %v84, 7
    %v86 = vsub.s32 1, %v85
    %v87 = vrot.slane %v78, %v86
    %v88 = vlaneseq
    %v89 = vshrl.u32 %v88, 7
    %v90 = vsub.s32 2, %v89
    %v91 = vrot.slane %v78, %v90
    %v97 = vunpack.c.l.b16 %v44
    %v98 = vunpack.c.l.b16 %v45
    %v99 = vpack.c.b16 %v98, %v97
    %v133 = vunpack.c.l.b16 %v46
    %v134 = vunpack.c.h.b16 %v46
    %v135 = vunpack.c.l.b16 %v47
    %v136 = vunpack.c.l.b16 %v48
    %v137 = vunpack.c.h.b16 %v48
    %v138 = vunpack.c.l.b16 %v49
    %v139 = vunpack.c.l.b16 %v50
    %v140 = vunpack.c.h.b16 %v50
    %v141 = vunpack.c.l.b16 %v51
    %v142 = vunpack.c.l.b16 %v52
    %v143 = vunpack.c.h.b16 %v52
    %v144 = vunpack.c.l.b16 %v53
    %v145 = vunpack.c.l.b16 %v54
    %v146 = vunpack.c.h.b16 %v54
    %v147 = vunpack.c.l.b16 %v55
    %v148 = vunpack.c.l.b16 %v56
    %v149 = vunpack.c.h.b16 %v56
    %v150 = vunpack.c.l.b16 %v57
    %v151 = vunpack.c.l.b16 %v58
    %v152 = vunpack.c.h.b16 %v58
    %v153 = vunpack.c.l.b16 %v59
    %v154 = vunpack.c.l.b16 %v60
    %v155 = vunpack.c.h.b16 %v60
    %v156 = vunpack.c.l.b16 %v61
    %v157 = vunpack.c.l.b16 %v62
    %v158 = vunpack.c.h.b16 %v62
    %v159 = vunpack.c.l.b16 %v63
    %v160 = vunpack.c.l.b16 %v64
    %v161 = vunpack.c.h.b16 %v64
    %v162 = vunpack.c.l.b16 %v65
    %v163 = vunpack.c.l.b16 %v66
    %v164 = vunpack.c.h.b16 %v66
    %v165 = vunpack.c.l.b16 %v67
    %v166 = vunpack.c.l.b16 %v68
    %v167 = vunpack.c.h.b16 %v68
    %v168 = vunpack.c.l.b16 %v69
    %v169 = vunpack.c.l.b16 %v70
    %v170 = vunpack.c.h.b16 %v70
    %v171 = vunpack.c.l.b16 %v71
    %v172 = vunpack.c.l.b16 %v72
    %v173 = vunpack.c.h.b16 %v72
    %v174 = vunpack.c.l.b16 %v73
    %v175 = vunpack.c.l.b16 %v74
    %v176 = vunpack.c.h.b16 %v74
    %v177 = vunpack.c.l.b16 %v75
    %v178 = vunpack.c.l.b16 %v76
    %v179 = vunpack.c.h.b16 %v76
    %v180 = vunpack.c.l.b16 %v77
    %v181 = vpack.c.b16 %v136, %v133
    %v182 = vpack.c.b16 %v137, %v134
    %v183 = vpack.c.b16 %v138, %v135
    %v184 = vpack.c.b16 %v142, %v139
    %v185 = vpack.c.b16 %v143, %v140
    %v186 = vpack.c.b16 %v144, %v141
    %v187 = vpack.c.b16 %v148, %v145
    %v188 = vpack.c.b16 %v149, %v146
    %v189 = vpack.c.b16 %v150, %v147
    %v190 = vpack.c.b16 %v154, %v151
    %v191 = vpack.c.b16 %v155, %v152
    %v192 = vpack.c.b16 %v156, %v153
    %v193 = vpack.c.b16 %v160, %v157
    %v194 = vpack.c.b16 %v161, %v158
    %v195 = vpack.c.b16 %v162, %v159
    %v196 = vpack.c.b16 %v166, %v163
    %v197 = vpack.c.b16 %v167, %v164
    %v198 = vpack.c.b16 %v168, %v165
    %v199 = vpack.c.b16 %v172, %v169
    %v200 = vpack.c.b16 %v173, %v170
    %v201 = vpack.c.b16 %v174, %v171
    %v202 = vpack.c.b16 %v178, %v175
    %v203 = vpack.c.b16 %v179, %v176
    %v204 = vpack.c.b16 %v180, %v177
    %229 = vmatprep.subr.bf16.mxu0 %v182
    %230 = vmatpush1.bf16.msra.mxu0 %v181
    %231 = vmatprep.subr.bf16.mxu0 %v185
    %232 = vmatpush1.bf16.msra.mxu0 %v184
    %233 = vmatprep.subr.bf16.mxu0 %v188
    %234 = vmatpush1.bf16.msra.mxu0 %v187
    %235 = vmatprep.subr.bf16.mxu0 %v191
    %236 = vmatpush1.bf16.msra.mxu0 %v190
    %237 = vmatprep.subr.bf16.mxu0 %v194
    %238 = vmatpush1.bf16.msra.mxu0 %v193
    %239 = vmatprep.subr.bf16.mxu0 %v197
    %240 = vmatpush1.bf16.msra.mxu0 %v196
    %241 = vmatprep.subr.bf16.mxu0 %v200
    %242 = vmatpush1.bf16.msra.mxu0 %v199
    %243 = vmatprep.subr.bf16.mxu0 %v203
    %244 = vmatpush1.bf16.msra.mxu0 %v202
    %245 = vmatprep.subr.bf16.mxu0 0
    %246 = vmatpush1.bf16.msra.mxu0 0
    %247 = vmatprep.subr.bf16.mxu0 0
    %248 = vmatpush1.bf16.msra.mxu0 0
    %249 = vmatprep.subr.bf16.mxu0 0
    %250 = vmatpush1.bf16.msra.mxu0 0
    %251 = vmatprep.subr.bf16.mxu0 0
    %252 = vmatpush1.bf16.msra.mxu0 0
    %253 = vmatprep.subr.bf16.mxu0 0
    %254 = vmatpush1.bf16.msra.mxu0 0
    %255 = vmatprep.subr.bf16.mxu0 0
    %256 = vmatpush1.bf16.msra.mxu0 0
    %257 = vmatprep.subr.bf16.mxu0 0
    %258 = vmatpush1.bf16.msra.mxu0 0
    %259 = vmatprep.subr.bf16.mxu0 0
    %260 = vmatpush1.bf16.msra.mxu0 0
    %261 = vmatprep.mubr.bf16.mxu0 0
    %262 = vmatmul.mubr.bf16.gmra.mrb[0].mxu0 %v99
    %v263 = vpop.f32.mrb[0].mxu0
    %v264 = vadd.f32 %v83, %v263
    %v265 = vpop.f32.mrb[0].mxu0
    %v266 = vadd.f32 %v87, %v265
    %v267 = vpop.f32.mrb[0].mxu0
    %v268 = vadd.f32 %v83, %v267
    %v269 = vpop.f32.mrb[0].mxu0
    %v270 = vadd.f32 %v87, %v269
    %271 = vdwg.mxu0
    %272 = vmatprep.subr.bf16.mxu0 0
    %273 = vmatpush1.bf16.msra.mxu0 %v183
    %274 = vmatprep.subr.bf16.mxu0 0
    %275 = vmatpush1.bf16.msra.mxu0 %v186
    %276 = vmatprep.subr.bf16.mxu0 0
    %277 = vmatpush1.bf16.msra.mxu0 %v189
    %278 = vmatprep.subr.bf16.mxu0 0
    %279 = vmatpush1.bf16.msra.mxu0 %v192
    %280 = vmatprep.subr.bf16.mxu0 0
    %281 = vmatpush1.bf16.msra.mxu0 %v195
    %282 = vmatprep.subr.bf16.mxu0 0
    %283 = vmatpush1.bf16.msra.mxu0 %v198
    %284 = vmatprep.subr.bf16.mxu0 0
    %285 = vmatpush1.bf16.msra.mxu0 %v201
    %286 = vmatprep.subr.bf16.mxu0 0
    %287 = vmatpush1.bf16.msra.mxu0 %v204
    %288 = vmatprep.subr.bf16.mxu0 0
    %289 = vmatpush1.bf16.msra.mxu0 0
    %290 = vmatprep.subr.bf16.mxu0 0
    %291 = vmatpush1.bf16.msra.mxu0 0
    %292 = vmatprep.subr.bf16.mxu0 0
    %293 = vmatpush1.bf16.msra.mxu0 0
    %294 = vmatprep.subr.bf16.mxu0 0
    %295 = vmatpush1.bf16.msra.mxu0 0
    %296 = vmatprep.subr.bf16.mxu0 0
    %297 = vmatpush1.bf16.msra.mxu0 0
    %298 = vmatprep.subr.bf16.mxu0 0
    %299 = vmatpush1.bf16.msra.mxu0 0
    %300 = vmatprep.subr.bf16.mxu0 0
    %301 = vmatpush1.bf16.msra.mxu0 0
    %302 = vmatprep.subr.bf16.mxu0 0
    %303 = vmatpush1.bf16.msra.mxu0 0
    %304 = vmatprep.mubr.bf16.mxu0 0
    %305 = vmatmul.mubr.bf16.gmra.mrb[0].mxu0 %v99
    %v306 = vpop.f32.mrb[0].mxu0
    %v307 = vadd.f32 %v91, %v306
    %v308 = vpop.f32.mrb[0].mxu0
    %v309 = vpop.f32.mrb[0].mxu0
    %v310 = vadd.f32 %v91, %v309
    %v311 = vpop.f32.mrb[0].mxu0
    %312 = vdwg.mxu0
    %313 = vst [vmem:[#allocation7] sm:$0xff] %v264
    %314 = vst [vmem:[#allocation7 + $0x8] sm:$0xff] %v266
    %315 = vst [vmem:[#allocation7 + $0x10] sm:$0xff] %v307
    %316 = vst [vmem:[#allocation7 + $0x18] sm:$0xff] %v268
    %317 = vst [vmem:[#allocation7 + $0x20] sm:$0xff] %v270
    %318 = vst [vmem:[#allocation7 + $0x28] sm:$0xff] %v310
    // Predicated region
    $region22: #{tpu_custom_call.1} parent=1 // pred_check
      _
    $region23: #{tpu_custom_call.1} parent=1 // pred_check_branch
      %320 = sbr.rel (0) target = $region25
    $region24: #{tpu_custom_call.1} parent=1 // pred_region
      %s322 = ssub.s32 768, 768
      %323 = vsyncadd [#allocation4], %s322
      %s324 = sshll.u32 [#allocation7], 4
      %s325 = int_to_ptr.vmem [resolvable:$true] %s324
      %330 = dma.vmem_to_hbm [thread:$0]  %s325, 768, %s3, [#allocation4], 384, 384, 24
    $region25: #{tpu_custom_call.1} parent=1 // pred_fallthru
      _
    // Predicated region
    $region26: #{tpu_custom_call.1} parent=1 // pred_check
      _
    $region27: #{tpu_custom_call.1} parent=1 // pred_check_branch
      %332 = sbr.rel (0) target = $region29
    $region28: #{tpu_custom_call.1} parent=1 // pred_region
      %333 = dma.done [#allocation4], 768
    $region29: #{tpu_custom_call.1} parent=1 // pred_fallthru
      _
    %334 = vsyncpa [#allocation3], 1
    %335 = vsyncpa [#allocation6], 1
    %336 = vsyncpa [#allocation4], 1

</llo_original>
